<compile_context>
chip_gen: v6e
topology: v6e:2x2x1
jax: 0.10.0
libtpu: 0.0.40
codegen_flags: <defaults>
</compile_context>

<pallas_src>
import jax
import jax.numpy as jnp
from jax.experimental import pallas as pl
from jax.experimental.pallas import tpu as pltpu


def _matmul_kernel(w_ref, h_ref, o_ref):
    """One output tile: o = W_tile @ H_tile (full K in a single block)."""
    o_ref[...] = jnp.dot(
        w_ref[...], h_ref[...], preferred_element_type=jnp.float32
    ).astype(o_ref.dtype)


def _round_up(x, mult):
    return ((x + mult - 1) // mult) * mult


def _cdiv(a, b):
    return (a + b - 1) // b


def nmf_forward(W, H, *, tm=None, tn=None):
    """Compute W @ H with a Pallas TPU kernel (forward pass of the NMF model).

    W: (m, k) float array, H: (k, n) float array -> (m, n) array.
    """
    m, k = W.shape
    k2, n = H.shape
    assert k == k2, "inner dims must match"
    out_dtype = jnp.result_type(W.dtype, H.dtype)

    # ---- tile sizes ---------------------------------------------------------
    # Mem-bound kernel: bias toward a wide (lane-dense) tn.  Use a single
    # full-n block when n <= 4K (rounded to 128), otherwise tn=2048.
    # tm defaults to 512 (multiple of 8).  No host-side padding: ragged edges
    # are handled by the cdiv grid + Pallas edge-block masking.
    if tn is None:
        n_rounded = _round_up(max(n, 1), 128)
        tn = n_rounded if n_rounded <= 4096 else 2048
    if tm is None:
        tm = min(512, _round_up(max(m, 1), 8))
    tm = _round_up(max(tm, 8), 8)
    tn = _round_up(max(tn, 128), 128)

    gm = _cdiv(m, tm)
    gn = _cdiv(n, tn)

    # v7x has 2 TensorCores: if a large problem collapsed to a 1x1 grid,
    # split one axis so both cores get a block (no-op / harmless on v5e/v6e).
    if gm == 1 and gn == 1 and m * n >= 512 * 512:
        if tn >= 256:
            tn = _round_up(_cdiv(tn, 2), 128)
        elif tm >= 16:
            tm = _round_up(_cdiv(tm, 2), 8)
        gm = _cdiv(m, tm)
        gn = _cdiv(n, tn)

    w_bytes = W.dtype.itemsize
    h_bytes = H.dtype.itemsize
    o_bytes = jnp.dtype(out_dtype).itemsize

    # ---- grid axis order: minimize input re-read traffic --------------------
    # With the re-read operand on the inner axis, the outer-axis operand is
    # read exactly once.  Option A (i outer, j inner): H re-read gm times.
    # Option B (j outer, i inner): W re-read gn times.  Pick the cheaper one.
    h_reread_bytes = (gm - 1) * k * n * h_bytes   # option A extra traffic
    w_reread_bytes = (gn - 1) * m * k * w_bytes   # option B extra traffic

    if h_reread_bytes <= w_reread_bytes:
        # Option A: grid = (i, j)
        grid = (gm, gn)
        w_spec = pl.BlockSpec((tm, k), lambda i, j: (i, 0))
        h_spec = pl.BlockSpec((k, tn), lambda i, j: (0, j))
        o_spec = pl.BlockSpec((tm, tn), lambda i, j: (i, j))
        w_reads, h_reads = 1, gm
    else:
        # Option B: grid = (j, i)
        grid = (gn, gm)
        w_spec = pl.BlockSpec((tm, k), lambda j, i: (i, 0))
        h_spec = pl.BlockSpec((k, tn), lambda j, i: (0, j))
        o_spec = pl.BlockSpec((tm, tn), lambda j, i: (i, j))
        w_reads, h_reads = gn, 1

    # ---- VMEM budget (double-buffered tiles), safe on v5e/v6e/v7x -----------
    tile_bytes = 2 * (tm * tn * o_bytes + tm * k * w_bytes + k * tn * h_bytes)
    vmem_limit = min(48 << 20, max(32 << 20, int(tile_bytes * 3 // 2)))

    bytes_accessed = (
        w_reads * m * k * w_bytes
        + h_reads * k * n * h_bytes
        + m * n * o_bytes
    )

    out = pl.pallas_call(
        _matmul_kernel,
        out_shape=jax.ShapeDtypeStruct((m, n), out_dtype),
        grid_spec=pltpu.PrefetchScalarGridSpec(
            num_scalar_prefetch=0,
            grid=grid,
            in_specs=[w_spec, h_spec],
            out_specs=o_spec,
        ),
        compiler_params=pltpu.CompilerParams(
            dimension_semantics=("parallel", "parallel"),
            vmem_limit_bytes=vmem_limit,
        ),
        cost_estimate=pl.CostEstimate(
            flops=2 * m * n * k,
            transcendentals=0,
            bytes_accessed=bytes_accessed,
        ),
    )(W, H)

    return out


def init_params(key, m, n, n_components):
    """Deterministic, nonnegative initialization of X, W and H.

    The original module initializes W, H with sklearn NMF (nndsvd); here we
    use |N(0,1)| draws from a fixed PRNG key, which preserves shapes, dtypes
    and nonnegativity.
    """
    # TODO(synk): nndsvd (SVD-based sklearn) initialization and the training
    # loss_function are host-side / training glue, not part of forward();
    # left out of the Pallas translation.
    kx, kw, kh = jax.random.split(key, 3)
    X = jnp.abs(jax.random.normal(kx, (m, n), dtype=jnp.float32))
    W = jnp.abs(jax.random.normal(kw, (m, n_components), dtype=jnp.float32))
    H = jnp.abs(jax.random.normal(kh, (n_components, n), dtype=jnp.float32))
    return X, W, H


if __name__ == "__main__":
    # Small shapes consistent with the module: X is (samples x features),
    # W is (samples x n_components), H is (n_components x features).
    m, n, n_components = 16, 32, 8

    key = jax.random.PRNGKey(0)
    X, W, H = init_params(key, m, n, n_components)

    out = jax.block_until_ready(nmf_forward(W, H))

    # Sanity check against plain-JAX reference (same semantics as torch.mm).
    ref = W @ H
    assert out.shape == (m, n)
    assert out.dtype == jnp.float32
    assert jnp.allclose(out, ref, rtol=1e-5, atol=1e-5)

    # A second, ragged / larger shape exercising the cdiv-grid edge-block path
    # (no host-side padding, ragged m and n).
    m2, n2, k2 = 600, 1000, 24
    _, W2, H2 = init_params(jax.random.PRNGKey(1), m2, n2, k2)
    out2 = jax.block_until_ready(nmf_forward(W2, H2))
    assert out2.shape == (m2, n2)
    assert jnp.allclose(out2, W2 @ H2, rtol=1e-4, atol=1e-4)

    # A skewed shape that triggers the grid-axis-order swap (many row tiles,
    # single column tile).
    m3, n3, k3 = 4096, 256, 16
    _, W3, H3 = init_params(jax.random.PRNGKey(2), m3, n3, k3)
    out3 = jax.block_until_ready(nmf_forward(W3, H3, tm=256))
    assert out3.shape == (m3, n3)
    assert jnp.allclose(out3, W3 @ H3, rtol=1e-4, atol=1e-4)

    print("KERNEL_OK")
</pallas_src>

<mosaic_0001>
module attributes {stable_mosaic.version = 11 : i64} {
  func.func @_matmul_kernel(%arg0: i32, %arg1: i32, %arg2: memref<16x8xf32, #tpu.memory_space<vmem>>, %arg3: memref<8x128xf32, #tpu.memory_space<vmem>>, %arg4: memref<16x128xf32, #tpu.memory_space<vmem>>) attributes {dimension_semantics = [#tpu.dimension_semantics<parallel>, #tpu.dimension_semantics<parallel>], iteration_bounds = array<i64: 1, 1>, scalar_prefetch = 0 : i64, scratch_operands = 0 : i64, tpu.core_type = #tpu.core_type<tc>, window_params = [{transform_indices = @transform_0, window_bounds = array<i64: 16, 8>}, {transform_indices = @transform_1, window_bounds = array<i64: 8, 128>}, {transform_indices = @transform_2, window_bounds = array<i64: 16, 128>}]} {
    %c0 = arith.constant 0 : index
    %c0_0 = arith.constant 0 : index
    %0 = vector.load %arg2[%c0, %c0_0] : memref<16x8xf32, #tpu.memory_space<vmem>>, vector<16x8xf32>
    %c0_1 = arith.constant 0 : index
    %c0_2 = arith.constant 0 : index
    %1 = vector.load %arg3[%c0_1, %c0_2] : memref<8x128xf32, #tpu.memory_space<vmem>>, vector<8x128xf32>
    %cst = arith.constant dense<0.000000e+00> : vector<16x128xf32>
    %2 = tpu.matmul %0, %1, %cst {dimension_numbers = #tpu.dot_dimension_numbers<[1], [0], [0], [1], [0, 0, 1, 1], [], []>} : vector<16x8xf32>, vector<8x128xf32>, vector<16x128xf32> -> vector<16x128xf32>
    %c0_3 = arith.constant 0 : index
    %c0_4 = arith.constant 0 : index
    %3 = vector.load %arg4[%c0_3, %c0_4] : memref<16x128xf32, #tpu.memory_space<vmem>>, vector<16x128xf32>
    tpu.vector_store %arg4[%c0_3, %c0_4], %2 {strides = array<i32>} : memref<16x128xf32, #tpu.memory_space<vmem>>, vector<16x128xf32>,
    return
  }
  func.func @transform_0(%arg0: i32, %arg1: i32) -> (i32, i32) {
    %c0_i32 = arith.constant 0 : i32
    %c0_i32_0 = arith.constant 0 : i32
    return %arg0, %c0_i32 : i32, i32
  }
  func.func @transform_1(%arg0: i32, %arg1: i32) -> (i32, i32) {
    %c0_i32 = arith.constant 0 : i32
    %c0_i32_0 = arith.constant 0 : i32
    return %c0_i32, %arg1 : i32, i32
  }
  func.func @transform_2(%arg0: i32, %arg1: i32) -> (i32, i32) {
    %c0_i32 = arith.constant 0 : i32
    return %arg0, %arg1 : i32, i32
  }
}

</mosaic_0001>

<llo_original>
// kernel: tpu_custom_call.1
$region0: #{tpu_custom_call.1}
  #allocation0 [shape = 'u32[]', space=smem, size = 0x4, offset = 0x4, fixed_abs, tag = 'smem constant byte address 0x4 - core index']
  #allocation1 [shape = 'u32[144,128]{1,0:T(1,128)}', space=vmem, size = 0x12000, scoped, tag = 'internal scratch']
  %s0 = inlined_call_operand.vmem [shape: f32[16,8], index: 0, kind: input, shape index: {}]
  %s1 = inlined_call_operand.vmem [shape: f32[8,32], index: 1, kind: input, shape index: {}]
  %s2 = inlined_call_operand.hbm [shape: f32[16,32], index: 2, kind: output, shape index: {}]
  %s3 = sld [smem:[#allocation0]]
  $region18: #{tpu_custom_call.1} parent=0
    _
  %s5 = ssub.s32 1, %s3
  %s6 = scalar_select 0, %s5, %s3
  $region1: #{tpu_custom_call.1} parent=0
    #allocation2 [shape = 'u8[8192]{0}', space=vmem, size = 0x2000, scoped, tag = 'output window, operand 0, single buffered']
    #allocation3 [shape = 's32[1]{0}', space=sflag, size = 0x4, scoped, tag = 'scoped memory for tpu_custom_call.1']
    %7 = vsyncpa [#allocation3], 0
    // Predicated region
    $region2: #{tpu_custom_call.1} parent=1 // pred_check
      _
    $region3: #{tpu_custom_call.1} parent=1 // pred_check_branch
      %9 = sbr.rel (0) target = $region5
    $region4: #{tpu_custom_call.1} parent=1 // pred_region
      _
    $region5: #{tpu_custom_call.1} parent=1 // pred_fallthru
      _
    // Predicated region
    $region6: #{tpu_custom_call.1} parent=1 // pred_check
      _
    $region7: #{tpu_custom_call.1} parent=1 // pred_check_branch
      %11 = sbr.rel (0) target = $region9
    $region8: #{tpu_custom_call.1} parent=1 // pred_region
      _
    $region9: #{tpu_custom_call.1} parent=1 // pred_fallthru
      _
    %v12 = vld [vmem:[%s0] sm:$0xff]
    %v13 = vld [vmem:[%s0 + $0x8] sm:$0xff]
    %v14 = vld [vmem:[%s1] sm:$0xff]
    %vm15 = vcmask 64512
    %v17 = vsel %vm15, %v12, 0
    %v20 = vsel %vm15, %v13, 0
    %22 = vmatprep.subr.mxu0 0.0
    %23 = vmatpush1.msra.mxu0 0.0
    %24 = vmatprep.subr.mxu0 0.0
    %25 = vmatpush1.msra.mxu0 0.0
    %26 = vmatprep.subr.mxu0 0.0
    %27 = vmatpush1.msra.mxu0 0.0
    %28 = vmatprep.subr.mxu0 0.0
    %29 = vmatpush1.msra.mxu0 0.0
    %30 = vmatprep.subr.mxu0 0.0
    %31 = vmatpush1.msra.mxu0 0.0
    %32 = vmatprep.subr.mxu0 0.0
    %33 = vmatpush1.msra.mxu0 0.0
    %34 = vmatprep.subr.mxu0 0.0
    %35 = vmatpush1.msra.mxu0 0.0
    %36 = vmatprep.subr.mxu0 0.0
    %37 = vmatpush1.msra.mxu0 0.0
    %38 = vmatprep.subr.mxu0 0.0
    %39 = vmatpush1.msra.mxu0 0.0
    %40 = vmatprep.subr.mxu0 0.0
    %41 = vmatpush1.msra.mxu0 0.0
    %42 = vmatprep.subr.mxu0 0.0
    %43 = vmatpush1.msra.mxu0 0.0
    %44 = vmatprep.subr.mxu0 0.0
    %45 = vmatpush1.msra.mxu0 0.0
    %46 = vmatprep.subr.mxu0 0.0
    %47 = vmatpush1.msra.mxu0 0.0
    %48 = vmatprep.subr.mxu0 0.0
    %49 = vmatpush1.msra.mxu0 0.0
    %50 = vmatprep.subr.mxu0 0.0
    %51 = vmatpush1.msra.mxu0 0.0
    %52 = vmatprep.subr.mxu0 0.0
    %53 = vmatpush1.msra.mxu0 %v14
    %54 = vmatprep.subr.mxu0 0.0
    %55 = vmatpush2.msra.mxu0 0.0
    %56 = vmatprep.subr.mxu0 0.0
    %57 = vmatpush2.msra.mxu0 0.0
    %58 = vmatprep.subr.mxu0 0.0
    %59 = vmatpush2.msra.mxu0 0.0
    %60 = vmatprep.subr.mxu0 0.0
    %61 = vmatpush2.msra.mxu0 0.0
    %62 = vmatprep.subr.mxu0 0.0
    %63 = vmatpush2.msra.mxu0 0.0
    %64 = vmatprep.subr.mxu0 0.0
    %65 = vmatpush2.msra.mxu0 0.0
    %66 = vmatprep.subr.mxu0 0.0
    %67 = vmatpush2.msra.mxu0 0.0
    %68 = vmatprep.subr.mxu0 0.0
    %69 = vmatpush2.msra.mxu0 0.0
    %70 = vmatprep.subr.mxu0 0.0
    %71 = vmatpush2.msra.mxu0 0.0
    %72 = vmatprep.subr.mxu0 0.0
    %73 = vmatpush2.msra.mxu0 0.0
    %74 = vmatprep.subr.mxu0 0.0
    %75 = vmatpush2.msra.mxu0 0.0
    %76 = vmatprep.subr.mxu0 0.0
    %77 = vmatpush2.msra.mxu0 0.0
    %78 = vmatprep.subr.mxu0 0.0
    %79 = vmatpush2.msra.mxu0 0.0
    %80 = vmatprep.subr.mxu0 0.0
    %81 = vmatpush2.msra.mxu0 0.0
    %82 = vmatprep.subr.mxu0 0.0
    %83 = vmatpush2.msra.mxu0 0.0
    %84 = vmatprep.subr.mxu0 0.0
    %85 = vmatpush2.msra.mxu0 0.0
    %86 = vmatprep.mubr.f32.mxu0 0.0
    %87 = vmatmul.mubr.f32.gmra.mxu0 %v17
    %v88 = vpop.f32.mrf.mxu0
    %v89 = vadd.f32 0.0, %v88
    %v90 = vpop.f32.mrf.mxu0
    %91 = vmatprep.mubr.f32.mxu0 0.0
    %92 = vmatmul.mubr.f32.gmra.mxu0 %v20
    %v93 = vpop.f32.mrf.mxu0
    %v94 = vadd.f32 0.0, %v93
    %v95 = vpop.f32.mrf.mxu0
    %96 = vdwg.mxu0
    %97 = vst [vmem:[#allocation2] sm:$0xff] %v89
    %98 = vst [vmem:[#allocation2 + $0x8] sm:$0xff] %v94
    // Predicated region
    $region10: #{tpu_custom_call.1} parent=1 // pred_check
      _
    $region11: #{tpu_custom_call.1} parent=1 // pred_check_branch
      %100 = sbr.rel (0) target = $region13
    $region12: #{tpu_custom_call.1} parent=1 // pred_region
      %s102 = ssub.s32 256, 256
      %103 = vsyncadd [#allocation3], %s102
      %s104 = sshll.u32 [#allocation2], 4
      %s105 = int_to_ptr.vmem [resolvable:$true] %s104
      %110 = dma.vmem_to_hbm [thread:$0]  %s105, 256, %s2, [#allocation3], 128, 128, 8
    $region13: #{tpu_custom_call.1} parent=1 // pred_fallthru
      _
    // Predicated region
    $region14: #{tpu_custom_call.1} parent=1 // pred_check
      _
    $region15: #{tpu_custom_call.1} parent=1 // pred_check_branch
      %112 = sbr.rel (0) target = $region17
    $region16: #{tpu_custom_call.1} parent=1 // pred_region
      %113 = dma.done [#allocation3], 256
    $region17: #{tpu_custom_call.1} parent=1 // pred_fallthru
      _
    %114 = vsyncpa [#allocation3], 1

</llo_original>
